<compile_context>
chip_gen: v5e
topology: v5e:2x2
jax: 0.10.0
libtpu: 0.0.40
codegen_flags: <defaults>
</compile_context>

<pallas_src>
import functools
import math

import jax
import jax.numpy as jnp
import numpy as np
from jax.experimental import pallas as pl
from jax.experimental.pallas import tpu as pltpu


# ----------------------------------------------------------------------------
# Deterministic "parameter" construction (MFCC has no learned weights; these
# are the fixed DFT / mel / DCT buffers implied by the config).
# ----------------------------------------------------------------------------
def _round_up(x, m):
    return ((x + m - 1) // m) * m


def _hz_to_mel_htk(f):
    return 2595.0 * np.log10(1.0 + f / 700.0)


def _mel_to_hz_htk(m):
    return 700.0 * (10.0 ** (m / 2595.0) - 1.0)


def make_mel_filterbank(n_freqs, n_mels, sample_rate, f_min=0.0, f_max=None):
    """torchaudio.functional.melscale_fbanks (mel_scale='htk', norm=None)."""
    if f_max is None:
        f_max = float(sample_rate // 2)
    all_freqs = np.linspace(0.0, sample_rate // 2, n_freqs)
    m_min = _hz_to_mel_htk(f_min)
    m_max = _hz_to_mel_htk(f_max)
    m_pts = np.linspace(m_min, m_max, n_mels + 2)
    f_pts = _mel_to_hz_htk(m_pts)
    f_diff = f_pts[1:] - f_pts[:-1]                       # (n_mels+1,)
    slopes = f_pts[None, :] - all_freqs[:, None]          # (n_freqs, n_mels+2)
    down = -slopes[:, :-2] / f_diff[:-1]
    up = slopes[:, 2:] / f_diff[1:]
    fb = np.maximum(0.0, np.minimum(down, up))
    return fb.astype(np.float32)                          # (n_freqs, n_mels)


def make_dct_matrix(n_mfcc, n_mels):
    """torchaudio.functional.create_dct(n_mfcc, n_mels, norm='ortho') -> (n_mels, n_mfcc)."""
    n = np.arange(n_mels, dtype=np.float64)
    k = np.arange(n_mfcc, dtype=np.float64)[:, None]
    dct = np.cos(math.pi / n_mels * (n + 0.5) * k)        # (n_mfcc, n_mels)
    dct[0] *= 1.0 / math.sqrt(2.0)
    dct *= math.sqrt(2.0 / n_mels)
    return dct.T.astype(np.float32)                       # (n_mels, n_mfcc)


def make_fused_dft_and_mel(n_fft, n_mels, sample_rate):
    """Single-frame fused constants.

    W  (n_fft, L):  [hann*cos | hann*(-sin) | zero-pad],  L = round_up(2*n_freqs, 128)
    M2 (L, n_mels): mel filterbank duplicated across the cos/sin lane groups so
                    (x @ W)**2 @ M2 == (re**2 + im**2) @ melfb.
    """
    n_freqs = n_fft // 2 + 1
    lanes = _round_up(2 * n_freqs, 128)
    n = np.arange(n_fft, dtype=np.float64)
    k = np.arange(n_freqs, dtype=np.float64)
    window = 0.5 * (1.0 - np.cos(2.0 * math.pi * n / n_fft))   # hann, periodic
    ang = 2.0 * math.pi * np.outer(n, k) / n_fft               # (n_fft, n_freqs)
    w = np.zeros((n_fft, lanes), dtype=np.float32)
    w[:, :n_freqs] = window[:, None] * np.cos(ang)
    w[:, n_freqs:2 * n_freqs] = window[:, None] * (-np.sin(ang))

    melfb = make_mel_filterbank(n_freqs, n_mels, sample_rate)   # (n_freqs, n_mels)
    m2 = np.zeros((lanes, n_mels), dtype=np.float32)
    m2[:n_freqs] = melfb
    m2[n_freqs:2 * n_freqs] = melfb
    return w, m2


def make_pair_constants(n_fft, n_mels, n_mfcc, sample_rate):
    """Pair-packed constants: one kernel row = 3 hop-chunks = 2 frames.

    W_pair  (3*hop, 2L): even frame uses samples [0, n_fft), odd frame uses
                         samples [hop, hop+n_fft); each maps to its own
                         128-lane group.
    M2_pair (2L, 2*n_mels), DCT_pair (2*n_mels, 2*n_mfcc): block-diagonal so
    the two frames stay independent all the way to the packed MFCC output.
    """
    hop = n_fft // 2
    w, m2 = make_fused_dft_and_mel(n_fft, n_mels, sample_rate)   # (64,128),(128,16)
    lanes = w.shape[1]
    row_len = n_fft + hop                                        # 96
    w_pair = np.zeros((row_len, 2 * lanes), dtype=np.float32)
    w_pair[:n_fft, :lanes] = w                                   # even frame
    w_pair[hop:, lanes:] = w                                     # odd frame
    m2_pair = np.zeros((2 * lanes, 2 * n_mels), dtype=np.float32)
    m2_pair[:lanes, :n_mels] = m2
    m2_pair[lanes:, n_mels:] = m2
    dct = make_dct_matrix(n_mfcc, n_mels)                        # (n_mels, n_mfcc)
    dct_pair = np.zeros((2 * n_mels, 2 * n_mfcc), dtype=np.float32)
    dct_pair[:n_mels, :n_mfcc] = dct
    dct_pair[n_mels:, n_mfcc:] = dct
    return w_pair, m2_pair, dct_pair


# ----------------------------------------------------------------------------
# Pallas kernel: per (tm, 3*hop) pair-row tile do
#   fused windowed-rFFT matmul (both frames, 256 lanes) -> square
#   -> block-diag mel matmul (bf16) -> 10*log10 -> block-diag DCT matmul
# ----------------------------------------------------------------------------
_DB_SCALE = 10.0 / math.log(10.0)


def mfcc_pair_kernel(rows_ref, w_ref, mel2_ref, dct_ref, out_ref):
    # (tm, 96) bf16 @ (96, 256) bf16 -> f32 : windowed rDFT of BOTH frames
    # packed in each row (lanes [0:128] = even frame, [128:256] = odd frame).
    y = jnp.dot(rows_ref[...], w_ref[...], preferred_element_type=jnp.float32)
    # Power spectrum -> mel energies via the duplicated, block-diagonal mel
    # filterbank.  bf16 operands keep the MXU at full rate; accumulate in f32.
    p = (y * y).astype(jnp.bfloat16)
    mel = jnp.dot(p, mel2_ref[...], preferred_element_type=jnp.float32)
    # AmplitudeToDB('power', top_db=None): db_multiplier = log10(max(1e-10,1)) = 0.
    log_mel = _DB_SCALE * jnp.log(jnp.maximum(mel, 1e-10))
    # Block-diagonal DCT-II (ortho): (tm, 32) f32 @ (32, 16) f32 -> packed MFCCs.
    # TODO(synk): a 128-lane packed output (16 frames / row) would remove the
    # remaining masked stores but needs an in-kernel (tm,16)->(tm/16,256)
    # relayout; skipped for lowering-risk reasons.
    out_ref[...] = jnp.dot(log_mel, dct_ref[...],
                           preferred_element_type=jnp.float32)   # (tm, 2*n_mfcc)


def _pallas_mfcc_pairs(rows_flat, w_pair, mel2_pair, dct_pair, *, tm):
    n_rows, row_len = rows_flat.shape
    lanes2 = w_pair.shape[1]
    mels2 = mel2_pair.shape[1]
    mfcc2 = dct_pair.shape[1]
    assert n_rows % tm == 0 and tm % 16 == 0

    grid = (n_rows // tm,)
    flops = 2 * n_rows * (row_len * lanes2 + lanes2 * mels2 + mels2 * mfcc2)
    bytes_accessed = (n_rows * row_len * 2 + n_rows * mfcc2 * 4
                      + w_pair.size * 2 + mel2_pair.size * 2 + dct_pair.size * 4)

    return pl.pallas_call(
        mfcc_pair_kernel,
        out_shape=jax.ShapeDtypeStruct((n_rows, mfcc2), jnp.float32),
        grid_spec=pltpu.PrefetchScalarGridSpec(
            num_scalar_prefetch=0,
            grid=grid,
            in_specs=[
                # streamed pair-row tiles (bf16)
                pl.BlockSpec((tm, row_len), lambda i: (i, 0)),
                # constants: block index never changes -> fetched into VMEM once
                pl.BlockSpec((row_len, lanes2), lambda i: (0, 0)),
                pl.BlockSpec((lanes2, mels2), lambda i: (0, 0)),
                pl.BlockSpec((mels2, mfcc2), lambda i: (0, 0)),
            ],
            out_specs=pl.BlockSpec((tm, mfcc2), lambda i: (i, 0)),
        ),
        compiler_params=pltpu.CompilerParams(
            dimension_semantics=("parallel",),
            vmem_limit_bytes=32 * 1024 * 1024),
        cost_estimate=pl.CostEstimate(
            flops=flops,
            transcendentals=n_rows * mels2,
            bytes_accessed=bytes_accessed),
    )(rows_flat, w_pair, mel2_pair, dct_pair)


# ----------------------------------------------------------------------------
# Wrapper = AudioFeatureExtraction.forward
# ----------------------------------------------------------------------------
class AudioFeatureExtractionPallas:
    """forward(raw_wave: (B, n_samples)) -> (B, T, n_mfcc)"""

    def __init__(self, sample_rate=16000, n_mfcc=8, n_fft=64, hop_length=32,
                 n_mels=16):
        # TODO(synk): pair-packed framing assumes hop == n_fft//2; other
        # hop/n_fft ratios would need a gather (or roll) based fallback.
        assert n_fft == 2 * hop_length, "pair framing assumes hop == n_fft//2"
        self.n_fft = n_fft
        self.hop = hop_length
        self.n_mfcc = n_mfcc
        self.n_mels = n_mels
        wp, m2p, dp = make_pair_constants(n_fft, n_mels, n_mfcc, sample_rate)
        self.w_pair = jnp.asarray(wp, dtype=jnp.bfloat16)     # MXU RHS: bf16
        self.mel2_pair = jnp.asarray(m2p, dtype=jnp.bfloat16)  # MXU RHS: bf16
        self.dct_pair = jnp.asarray(dp)                        # f32 (log-domain)

    def _pair_rows(self, raw_wave):
        """Center reflect-pad and pack 2 frames (3 hop-chunks) per kernel row.

        No gather: only strided chunk slices + one concat (1.5x duplication of
        the wave instead of 2x for full frame materialization).
        """
        B, S = raw_wave.shape
        hop, n_fft = self.hop, self.n_fft
        pad = n_fft // 2
        # jnp reflect-pad needs n_samples > n_fft//2 (same constraint as torch).
        padded = jnp.pad(raw_wave, ((0, 0), (pad, pad)), mode="reflect")
        T = 1 + S // hop
        n_pairs = (T + 1) // 2
        need = 2 * hop * n_pairs + hop        # covers the last (possibly junk) odd frame
        if padded.shape[1] < need:
            padded = jnp.pad(padded, ((0, 0), (0, need - padded.shape[1])))
        chunks = padded[:, :need].astype(jnp.bfloat16)
        chunks = chunks.reshape(B, 2 * n_pairs + 1, hop)
        rows = jnp.concatenate(
            [chunks[:, 0:2 * n_pairs:2],
             chunks[:, 1:2 * n_pairs:2],
             chunks[:, 2:2 * n_pairs + 1:2]], axis=-1)        # (B, n_pairs, 3*hop)
        return rows, T, n_pairs

    @staticmethod
    def _choose_tile(n_rows, target=1024):
        # Big tiles (amortize the ~0.35us per-grid-step overhead; VMEM is not
        # binding at <~3 MiB/tile), rounded to the bf16 sublane tile (16), and
        # an even step count so the "parallel" axis splits cleanly across
        # v7x's two TensorCores.
        steps = max(1, -(-n_rows // target))
        if steps > 1 and steps % 2:
            steps += 1
        tm = min(target, _round_up(-(-n_rows // steps), 16))
        return tm, steps * tm

    @functools.partial(jax.jit, static_argnums=0)
    def __call__(self, raw_wave):
        raw_wave = raw_wave.astype(jnp.float32)
        B = raw_wave.shape[0]
        rows, T, n_pairs = self._pair_rows(raw_wave)
        n_rows = B * n_pairs
        flat = rows.reshape(n_rows, 3 * self.hop)
        tm, n_rows_pad = self._choose_tile(n_rows)
        if n_rows_pad != n_rows:
            flat = jnp.pad(flat, ((0, n_rows_pad - n_rows), (0, 0)))
        out = _pallas_mfcc_pairs(flat, self.w_pair, self.mel2_pair,
                                 self.dct_pair, tm=tm)          # (n_rows_pad, 16)
        # Un-pack the per-row frame pair: free row-major reshape, then drop the
        # junk odd frame (T odd) / padded rows.  torchaudio MFCC is
        # (B, n_mfcc, T); the module transposes to (B, T, n_mfcc) -- our
        # row-major frame layout already yields that.
        out = out[:n_rows].reshape(B, 2 * n_pairs, self.n_mfcc)[:, :T, :]
        return out


# ----------------------------------------------------------------------------
# Pure-JAX references for correctness checks.
# ----------------------------------------------------------------------------
def _reference_matched(raw_wave, fe: AudioFeatureExtractionPallas):
    """Same math as the kernel (bf16 rows / W / mel fb, pair packing), plain jnp."""
    rows, T, n_pairs = fe._pair_rows(raw_wave.astype(jnp.float32))
    B = raw_wave.shape[0]
    hi = jax.lax.Precision.HIGHEST
    y = jnp.einsum("bgf,fl->bgl", rows.astype(jnp.float32),
                   fe.w_pair.astype(jnp.float32), precision=hi)
    p = (y * y).astype(jnp.bfloat16).astype(jnp.float32)
    mel = jnp.einsum("bgl,lm->bgm", p, fe.mel2_pair.astype(jnp.float32),
                     precision=hi)
    log_mel = 10.0 * jnp.log10(jnp.maximum(mel, 1e-10))
    out = jnp.einsum("bgm,mc->bgc", log_mel, fe.dct_pair, precision=hi)
    return out.reshape(B, 2 * n_pairs, fe.n_mfcc)[:, :T, :]


def _reference_f32(raw_wave, sample_rate=16000, n_mfcc=8, n_fft=64,
                   hop_length=32, n_mels=16):
    """Full-f32 torchaudio-MFCC math (gather framing, unfused matrices)."""
    raw_wave = raw_wave.astype(jnp.float32)
    B, S = raw_wave.shape
    pad = n_fft // 2
    padded = jnp.pad(raw_wave, ((0, 0), (pad, pad)), mode="reflect")
    T = 1 + S // hop_length
    idx = jnp.arange(T)[:, None] * hop_length + jnp.arange(n_fft)[None, :]
    frames = padded[:, idx]                                       # (B, T, n_fft)
    n = np.arange(n_fft, dtype=np.float64)
    k = np.arange(n_fft // 2 + 1, dtype=np.float64)
    window = 0.5 * (1.0 - np.cos(2.0 * np.pi * n / n_fft))
    ang = 2.0 * np.pi * np.outer(n, k) / n_fft
    cosw = jnp.asarray((window[:, None] * np.cos(ang)).astype(np.float32))
    sinw = jnp.asarray((window[:, None] * -np.sin(ang)).astype(np.float32))
    hi = jax.lax.Precision.HIGHEST
    re = jnp.einsum("btf,fk->btk", frames, cosw, precision=hi)
    im = jnp.einsum("btf,fk->btk", frames, sinw, precision=hi)
    power = re * re + im * im
    melfb = jnp.asarray(make_mel_filterbank(n_fft // 2 + 1, n_mels, sample_rate))
    mel = jnp.einsum("btk,km->btm", power, melfb, precision=hi)
    log_mel = 10.0 * jnp.log10(jnp.maximum(mel, 1e-10))
    dct = jnp.asarray(make_dct_matrix(n_mfcc, n_mels))
    return jnp.einsum("btm,mc->btc", log_mel, dct, precision=hi)  # (B, T, n_mfcc)


if __name__ == "__main__":
    key = jax.random.PRNGKey(0)
    B, n_samples = 2, 256
    raw_wave = jax.random.normal(key, (B, n_samples), dtype=jnp.float32)

    fe = AudioFeatureExtractionPallas(sample_rate=16000, n_mfcc=8,
                                      n_fft=64, hop_length=32, n_mels=16)
    out = fe(raw_wave)
    jax.block_until_ready(out)

    T = 1 + n_samples // 32
    assert out.shape == (B, T, 8), out.shape

    # (1) tight check vs. a reference using the same bf16 inputs / fused math.
    ref_m = _reference_matched(raw_wave, fe)
    err_m = float(jnp.max(jnp.abs(out - ref_m)))
    assert jnp.allclose(out, ref_m, atol=5e-2, rtol=5e-3), err_m

    # (2) semantic check vs. the full-f32 torchaudio MFCC math (bf16 inputs
    #     introduce only small dB-scale rounding).
    ref_f = _reference_f32(raw_wave)
    err_f = float(jnp.max(jnp.abs(out - ref_f)))
    assert jnp.allclose(out, ref_f, atol=0.5, rtol=2e-2), err_f

    print("KERNEL_OK")
</pallas_src>

<mosaic_0001>
module attributes {stable_mosaic.version = 11 : i64} {
  func.func @mfcc_pair_kernel(%arg0: i32, %arg1: memref<16x96xbf16, #tpu.memory_space<vmem>>, %arg2: memref<96x256xbf16, #tpu.memory_space<vmem>>, %arg3: memref<256x32xbf16, #tpu.memory_space<vmem>>, %arg4: memref<32x16xf32, #tpu.memory_space<vmem>>, %arg5: memref<16x16xf32, #tpu.memory_space<vmem>>) attributes {dimension_semantics = [#tpu.dimension_semantics<parallel>], iteration_bounds = array<i64: 1>, scalar_prefetch = 0 : i64, scratch_operands = 0 : i64, tpu.core_type = #tpu.core_type<tc>, window_params = [{transform_indices = @transform_0, window_bounds = array<i64: 16, 96>}, {pipeline_mode = #tpu.pipeline_mode<synchronous>, transform_indices = @transform_1, window_bounds = array<i64: 96, 256>}, {pipeline_mode = #tpu.pipeline_mode<synchronous>, transform_indices = @transform_2, window_bounds = array<i64: 256, 32>}, {pipeline_mode = #tpu.pipeline_mode<synchronous>, transform_indices = @transform_3, window_bounds = array<i64: 32, 16>}, {transform_indices = @transform_4, window_bounds = array<i64: 16, 16>}]} {
    %c0 = arith.constant 0 : index
    %c0_0 = arith.constant 0 : index
    %0 = vector.load %arg1[%c0, %c0_0] : memref<16x96xbf16, #tpu.memory_space<vmem>>, vector<16x96xbf16>
    %c0_1 = arith.constant 0 : index
    %c0_2 = arith.constant 0 : index
    %1 = vector.load %arg2[%c0_1, %c0_2] : memref<96x256xbf16, #tpu.memory_space<vmem>>, vector<96x256xbf16>
    %cst = arith.constant dense<0.000000e+00> : vector<16x256xf32>
    %2 = tpu.matmul %0, %1, %cst {dimension_numbers = #tpu.dot_dimension_numbers<[1], [0], [0], [1], [0, 0, 1, 1], [], []>} : vector<16x96xbf16>, vector<96x256xbf16>, vector<16x256xf32> -> vector<16x256xf32>
    %3 = arith.mulf %2, %2 : vector<16x256xf32>
    %4 = arith.truncf %3 : vector<16x256xf32> to vector<16x256xbf16>
    %c0_3 = arith.constant 0 : index
    %c0_4 = arith.constant 0 : index
    %5 = vector.load %arg3[%c0_3, %c0_4] : memref<256x32xbf16, #tpu.memory_space<vmem>>, vector<256x32xbf16>
    %cst_5 = arith.constant dense<0.000000e+00> : vector<16x32xf32>
    %6 = tpu.matmul %4, %5, %cst_5 {dimension_numbers = #tpu.dot_dimension_numbers<[1], [0], [0], [1], [0, 0, 1, 1], [], []>} : vector<16x256xbf16>, vector<256x32xbf16>, vector<16x32xf32> -> vector<16x32xf32>
    %cst_6 = arith.constant 1.000000e-10 : f32
    %7 = vector.broadcast %cst_6 : f32 to vector<16x32xf32>
    %8 = arith.maximumf %6, %7 : vector<16x32xf32>
    %9 = math.log %8 : vector<16x32xf32>
    %cst_7 = arith.constant 4.34294462 : f32
    %10 = vector.broadcast %cst_7 : f32 to vector<16x32xf32>
    %11 = arith.mulf %10, %9 : vector<16x32xf32>
    %c0_8 = arith.constant 0 : index
    %c0_9 = arith.constant 0 : index
    %12 = vector.load %arg4[%c0_8, %c0_9] : memref<32x16xf32, #tpu.memory_space<vmem>>, vector<32x16xf32>
    %cst_10 = arith.constant dense<0.000000e+00> : vector<16x16xf32>
    %13 = tpu.matmul %11, %12, %cst_10 {dimension_numbers = #tpu.dot_dimension_numbers<[1], [0], [0], [1], [0, 0, 1, 1], [], []>} : vector<16x32xf32>, vector<32x16xf32>, vector<16x16xf32> -> vector<16x16xf32>
    %c0_11 = arith.constant 0 : index
    %c0_12 = arith.constant 0 : index
    %14 = vector.load %arg5[%c0_11, %c0_12] : memref<16x16xf32, #tpu.memory_space<vmem>>, vector<16x16xf32>
    tpu.vector_store %arg5[%c0_11, %c0_12], %13 {strides = array<i32>} : memref<16x16xf32, #tpu.memory_space<vmem>>, vector<16x16xf32>,
    return
  }
  func.func @transform_0(%arg0: i32) -> (i32, i32) {
    %c0_i32 = arith.constant 0 : i32
    %c0_i32_0 = arith.constant 0 : i32
    return %arg0, %c0_i32 : i32, i32
  }
  func.func @transform_1(%arg0: i32) -> (i32, i32) {
    %c0_i32 = arith.constant 0 : i32
    %c0_i32_0 = arith.constant 0 : i32
    %c0_i32_1 = arith.constant 0 : i32
    return %c0_i32, %c0_i32_0 : i32, i32
  }
  func.func @transform_2(%arg0: i32) -> (i32, i32) {
    %c0_i32 = arith.constant 0 : i32
    %c0_i32_0 = arith.constant 0 : i32
    %c0_i32_1 = arith.constant 0 : i32
    return %c0_i32, %c0_i32_0 : i32, i32
  }
  func.func @transform_3(%arg0: i32) -> (i32, i32) {
    %c0_i32 = arith.constant 0 : i32
    %c0_i32_0 = arith.constant 0 : i32
    %c0_i32_1 = arith.constant 0 : i32
    return %c0_i32, %c0_i32_0 : i32, i32
  }
  func.func @transform_4(%arg0: i32) -> (i32, i32) {
    %c0_i32 = arith.constant 0 : i32
    %c0_i32_0 = arith.constant 0 : i32
    return %arg0, %c0_i32 : i32, i32
  }
}

</mosaic_0001>

<llo_original>
// kernel: a_call__.1
$region0: #{a_call__.1}
  #allocation0 [shape = 'u32[]', space=smem, size = 0x4, offset = 0x4, fixed_abs, tag = 'smem constant byte address 0x4 - core index']
  #allocation1 [shape = 'u32[72,128]{1,0:T(1,128)}', space=vmem, size = 0x9000, scoped, tag = 'internal scratch']
  %s0 = inlined_call_operand.vmem [shape: bf16[16,96], index: 0, kind: input, shape index: {}]
  %s1 = inlined_call_operand.hbm [shape: bf16[96,256], index: 1, kind: input, shape index: {}]
  %s2 = inlined_call_operand.vmem [shape: bf16[256,32], index: 2, kind: input, shape index: {}]
  %s3 = inlined_call_operand.hbm [shape: f32[32,16], index: 3, kind: input, shape index: {}]
  %s4 = inlined_call_operand.vmem [shape: f32[16,16], index: 4, kind: output, shape index: {}]
  %s5 = sld [smem:[#allocation0]]
  $region34: #{a_call__.1} parent=0
    _
  %s7 = ssub.s32 1, %s5
  %s8 = scalar_select 0, %s7, %s5
  $region1: #{a_call__.1} parent=0
    #allocation2 [shape = 'u8[49152]{0}', space=vmem, size = 0xc000, scoped, tag = 'input window, operand 1, single buffered']
    #allocation3 [shape = 's32[1]{0}', space=sflag, size = 0x4, scoped, tag = 'scoped memory for a_call__.1']
    #allocation4 [shape = 'u8[16384]{0}', space=vmem, size = 0x4000, scoped, tag = 'input window, operand 3, single buffered']
    #allocation5 [shape = 's32[1]{0}', space=sflag, size = 0x4, scoped, tag = 'scoped memory for a_call__.1']
    %9 = vsyncpa [#allocation3], 0
    %10 = vsyncpa [#allocation5], 0
    // Predicated region
    $region2: #{a_call__.1} parent=1 // pred_check
      _
    $region3: #{a_call__.1} parent=1 // pred_check_branch
      %12 = sbr.rel (0) target = $region5
    $region4: #{a_call__.1} parent=1 // pred_region
      _
    $region5: #{a_call__.1} parent=1 // pred_fallthru
      _
    // Predicated region
    $region6: #{a_call__.1} parent=1 // pred_check
      _
    $region7: #{a_call__.1} parent=1 // pred_check_branch
      %14 = sbr.rel (0) target = $region9
    $region8: #{a_call__.1} parent=1 // pred_region
      %16 = vsyncadd [#allocation3], 0
      %s17 = sshll.u32 %s1, 4
      %s18 = int_to_ptr.hbm [resolvable:$true] %s17
      %s19 = sshll.u32 [#allocation2], 4
      %s20 = int_to_ptr.vmem [resolvable:$true] %s19
      %25 = dma.hbm_to_vmem [thread:$0]  %s18, 1536, %s20, [#allocation3], 128, 128, 8
    $region9: #{a_call__.1} parent=1 // pred_fallthru
      _
    // Predicated region
    $region10: #{a_call__.1} parent=1 // pred_check
      _
    $region11: #{a_call__.1} parent=1 // pred_check_branch
      %27 = sbr.rel (0) target = $region13
    $region12: #{a_call__.1} parent=1 // pred_region
      _
    $region13: #{a_call__.1} parent=1 // pred_fallthru
      _
    // Predicated region
    $region14: #{a_call__.1} parent=1 // pred_check
      _
    $region15: #{a_call__.1} parent=1 // pred_check_branch
      %29 = sbr.rel (0) target = $region17
    $region16: #{a_call__.1} parent=1 // pred_region
      %31 = vsyncadd [#allocation5], 0
      %s32 = sshll.u32 %s3, 4
      %s33 = int_to_ptr.hbm [resolvable:$true] %s32
      %s34 = sshll.u32 [#allocation4], 4
      %s35 = int_to_ptr.vmem [resolvable:$true] %s34
      %40 = dma.hbm_to_vmem [thread:$0]  %s33, 512, %s35, [#allocation5], 128, 128, 8
    $region17: #{a_call__.1} parent=1 // pred_fallthru
      _
    // Predicated region
    $region18: #{a_call__.1} parent=1 // pred_check
      _
    $region19: #{a_call__.1} parent=1 // pred_check_branch
      %42 = sbr.rel (0) target = $region21
    $region20: #{a_call__.1} parent=1 // pred_region
      %44 = dma.done [#allocation3], 1536
    $region21: #{a_call__.1} parent=1 // pred_fallthru
      _
    // Predicated region
    $region22: #{a_call__.1} parent=1 // pred_check
      _
    $region23: #{a_call__.1} parent=1 // pred_check_branch
      %46 = sbr.rel (0) target = $region25
    $region24: #{a_call__.1} parent=1 // pred_region
      %48 = dma.done [#allocation5], 512
    $region25: #{a_call__.1} parent=1 // pred_fallthru
      _
    %v50 = vld [vmem:[%s0] sm:$0xf]
    %v51 = vld [vmem:[%s0 + $0x4] sm:$0xf]
    %v52 = vld [vmem:[#allocation2] sm:$0xff]
    %v53 = vld [vmem:[#allocation2 + $0x8] sm:$0xff]
    %v54 = vld [vmem:[#allocation2 + $0x10] sm:$0xff]
    %v55 = vld [vmem:[#allocation2 + $0x18] sm:$0xff]
    %v56 = vld [vmem:[#allocation2 + $0x20] sm:$0xff]
    %v57 = vld [vmem:[#allocation2 + $0x28] sm:$0xff]
    %v58 = vld [vmem:[#allocation2 + $0x30] sm:$0xff]
    %v59 = vld [vmem:[#allocation2 + $0x38] sm:$0xff]
    %v60 = vld [vmem:[#allocation2 + $0x40] sm:$0xff]
    %v61 = vld [vmem:[#allocation2 + $0x48] sm:$0xff]
    %v62 = vld [vmem:[#allocation2 + $0x50] sm:$0xff]
    %v63 = vld [vmem:[#allocation2 + $0x58] sm:$0xff]
    %v66 = vunpack.c.l.b16 %v50
    %v67 = vunpack.c.l.b16 %v51
    %v68 = vpack.c.b16 %v67, %v66
    %v81 = vunpack.c.l.b16 %v52
    %v82 = vunpack.c.h.b16 %v52
    %v83 = vunpack.c.l.b16 %v53
    %v84 = vunpack.c.h.b16 %v53
    %v85 = vunpack.c.l.b16 %v54
    %v86 = vunpack.c.h.b16 %v54
    %v87 = vunpack.c.l.b16 %v55
    %v88 = vunpack.c.h.b16 %v55
    %v89 = vunpack.c.l.b16 %v56
    %v90 = vunpack.c.h.b16 %v56
    %v91 = vunpack.c.l.b16 %v57
    %v92 = vunpack.c.h.b16 %v57
    %v93 = vunpack.c.l.b16 %v58
    %v94 = vunpack.c.h.b16 %v58
    %v95 = vunpack.c.l.b16 %v59
    %v96 = vunpack.c.h.b16 %v59
    %v97 = vunpack.c.l.b16 %v60
    %v98 = vunpack.c.h.b16 %v60
    %v99 = vunpack.c.l.b16 %v61
    %v100 = vunpack.c.h.b16 %v61
    %v101 = vunpack.c.l.b16 %v62
    %v102 = vunpack.c.h.b16 %v62
    %v103 = vunpack.c.l.b16 %v63
    %v104 = vunpack.c.h.b16 %v63
    %v105 = vpack.c.b16 %v83, %v81
    %v106 = vpack.c.b16 %v84, %v82
    %v107 = vpack.c.b16 %v87, %v85
    %v108 = vpack.c.b16 %v88, %v86
    %v109 = vpack.c.b16 %v91, %v89
    %v110 = vpack.c.b16 %v92, %v90
    %v111 = vpack.c.b16 %v95, %v93
    %v112 = vpack.c.b16 %v96, %v94
    %v113 = vpack.c.b16 %v99, %v97
    %v114 = vpack.c.b16 %v100, %v98
    %v115 = vpack.c.b16 %v103, %v101
    %v116 = vpack.c.b16 %v104, %v102
    %vm129 = vcmask 785408
    %v131 = vsel %vm129, %v68, 0
    %133 = vmatpush.bf16.msra.mxu0 0
    %134 = vmatpush.bf16.msra.mxu0 0
    %135 = vmatpush.bf16.msra.mxu0 %v115
    %136 = vmatpush.bf16.msra.mxu0 %v113
    %137 = vmatpush.bf16.msra.mxu0 %v111
    %138 = vmatpush.bf16.msra.mxu0 %v109
    %139 = vmatpush.bf16.msra.mxu0 %v107
    %140 = vmatpush.bf16.msra.mxu0 %v105
    %141 = vmatmul.bf16.gmra.mxu0 %v131
    %v142 = vpop.f32.mrf.mxu0
    %v143 = vadd.f32 0.0, %v142
    %v144 = vpop.f32.mrf.mxu0
    %v145 = vadd.f32 0.0, %v144
    %146 = vdwg.mxu0
    %147 = vmatpush.bf16.msra.mxu0 0
    %148 = vmatpush.bf16.msra.mxu0 0
    %149 = vmatpush.bf16.msra.mxu0 %v116
    %150 = vmatpush.bf16.msra.mxu0 %v114
    %151 = vmatpush.bf16.msra.mxu0 %v112
    %152 = vmatpush.bf16.msra.mxu0 %v110
    %153 = vmatpush.bf16.msra.mxu0 %v108
    %154 = vmatpush.bf16.msra.mxu0 %v106
    %155 = vmatmul.bf16.gmra.mxu0 %v131
    %v156 = vpop.f32.mrf.mxu0
    %v157 = vadd.f32 0.0, %v156
    %v158 = vpop.f32.mrf.mxu0
    %v159 = vadd.f32 0.0, %v158
    %160 = vdwg.mxu0
    %v161 = vmul.f32 %v143, %v143
    %v162 = vmul.f32 %v157, %v157
    %v163 = vmul.f32 %v145, %v145
    %v164 = vmul.f32 %v159, %v159
    %v165 = vpack.c.bf16 %v163, %v161
    %v166 = vpack.c.bf16 %v164, %v162
    %v167 = vld [vmem:[%s2] sm:$0xf]
    %v168 = vld [vmem:[%s2 + $0x4] sm:$0xf]
    %v169 = vld [vmem:[%s2 + $0x8] sm:$0xf]
    %v170 = vld [vmem:[%s2 + $0xc] sm:$0xf]
    %v171 = vld [vmem:[%s2 + $0x10] sm:$0xf]
    %v172 = vld [vmem:[%s2 + $0x14] sm:$0xf]
    %v173 = vld [vmem:[%s2 + $0x18] sm:$0xf]
    %v174 = vld [vmem:[%s2 + $0x1c] sm:$0xf]
    %v175 = vld [vmem:[%s2 + $0x20] sm:$0xf]
    %v176 = vld [vmem:[%s2 + $0x24] sm:$0xf]
    %v177 = vld [vmem:[%s2 + $0x28] sm:$0xf]
    %v178 = vld [vmem:[%s2 + $0x2c] sm:$0xf]
    %v179 = vld [vmem:[%s2 + $0x30] sm:$0xf]
    %v180 = vld [vmem:[%s2 + $0x34] sm:$0xf]
    %v181 = vld [vmem:[%s2 + $0x38] sm:$0xf]
    %v182 = vld [vmem:[%s2 + $0x3c] sm:$0xf]
    %v183 = vld [vmem:[%s2 + $0x40] sm:$0xf]
    %v184 = vld [vmem:[%s2 + $0x44] sm:$0xf]
    %v185 = vld [vmem:[%s2 + $0x48] sm:$0xf]
    %v186 = vld [vmem:[%s2 + $0x4c] sm:$0xf]
    %v187 = vld [vmem:[%s2 + $0x50] sm:$0xf]
    %v188 = vld [vmem:[%s2 + $0x54] sm:$0xf]
    %v189 = vld [vmem:[%s2 + $0x58] sm:$0xf]
    %v190 = vld [vmem:[%s2 + $0x5c] sm:$0xf]
    %v191 = vld [vmem:[%s2 + $0x60] sm:$0xf]
    %v192 = vld [vmem:[%s2 + $0x64] sm:$0xf]
    %v193 = vld [vmem:[%s2 + $0x68] sm:$0xf]
    %v194 = vld [vmem:[%s2 + $0x6c] sm:$0xf]
    %v195 = vld [vmem:[%s2 + $0x70] sm:$0xf]
    %v196 = vld [vmem:[%s2 + $0x74] sm:$0xf]
    %v197 = vld [vmem:[%s2 + $0x78] sm:$0xf]
    %v198 = vld [vmem:[%s2 + $0x7c] sm:$0xf]
    %v231 = vunpack.c.l.b16 %v167
    %v232 = vunpack.c.l.b16 %v168
    %v233 = vunpack.c.l.b16 %v169
    %v234 = vunpack.c.l.b16 %v170
    %v235 = vunpack.c.l.b16 %v171
    %v236 = vunpack.c.l.b16 %v172
    %v237 = vunpack.c.l.b16 %v173
    %v238 = vunpack.c.l.b16 %v174
    %v239 = vunpack.c.l.b16 %v175
    %v240 = vunpack.c.l.b16 %v176
    %v241 = vunpack.c.l.b16 %v177
    %v242 = vunpack.c.l.b16 %v178
    %v243 = vunpack.c.l.b16 %v179
    %v244 = vunpack.c.l.b16 %v180
    %v245 = vunpack.c.l.b16 %v181
    %v246 = vunpack.c.l.b16 %v182
    %v247 = vunpack.c.l.b16 %v183
    %v248 = vunpack.c.l.b16 %v184
    %v249 = vunpack.c.l.b16 %v185
    %v250 = vunpack.c.l.b16 %v186
    %v251 = vunpack.c.l.b16 %v187
    %v252 = vunpack.c.l.b16 %v188
    %v253 = vunpack.c.l.b16 %v189
    %v254 = vunpack.c.l.b16 %v190
    %v255 = vunpack.c.l.b16 %v191
    %v256 = vunpack.c.l.b16 %v192
    %v257 = vunpack.c.l.b16 %v193
    %v258 = vunpack.c.l.b16 %v194
    %v259 = vunpack.c.l.b16 %v195
    %v260 = vunpack.c.l.b16 %v196
    %v261 = vunpack.c.l.b16 %v197
    %v262 = vunpack.c.l.b16 %v198
    %v263 = vpack.c.b16 %v232, %v231
    %v264 = vpack.c.b16 %v234, %v233
    %v265 = vpack.c.b16 %v236, %v235
    %v266 = vpack.c.b16 %v238, %v237
    %v267 = vpack.c.b16 %v240, %v239
    %v268 = vpack.c.b16 %v242, %v241
    %v269 = vpack.c.b16 %v244, %v243
    %v270 = vpack.c.b16 %v246, %v245
    %v271 = vpack.c.b16 %v248, %v247
    %v272 = vpack.c.b16 %v250, %v249
    %v273 = vpack.c.b16 %v252, %v251
    %v274 = vpack.c.b16 %v254, %v253
    %v275 = vpack.c.b16 %v256, %v255
    %v276 = vpack.c.b16 %v258, %v257
    %v277 = vpack.c.b16 %v260, %v259
    %v278 = vpack.c.b16 %v262, %v261
    %295 = vmatpush.bf16.msra.mxu0 %v270
    %296 = vmatpush.bf16.msra.mxu0 %v269
    %297 = vmatpush.bf16.msra.mxu0 %v268
    %298 = vmatpush.bf16.msra.mxu0 %v267
    %299 = vmatpush.bf16.msra.mxu0 %v266
    %300 = vmatpush.bf16.msra.mxu0 %v265
    %301 = vmatpush.bf16.msra.mxu0 %v264
    %302 = vmatpush.bf16.msra.mxu0 %v263
    %303 = vmatmul.bf16.gmra.mxu0 %v165
    %v304 = vpop.f32.mrf.mxu0
    %v305 = vadd.f32 0.0, %v304
    %v306 = vpop.f32.mrf.mxu0
    %v307 = vadd.f32 0.0, %v306
    %308 = vdwg.mxu0
    %309 = vmatpush.bf16.msra.mxu0 %v278
    %310 = vmatpush.bf16.msra.mxu0 %v277
    %311 = vmatpush.bf16.msra.mxu0 %v276
    %312 = vmatpush.bf16.msra.mxu0 %v275
    %313 = vmatpush.bf16.msra.mxu0 %v274
    %314 = vmatpush.bf16.msra.mxu0 %v273
    %315 = vmatpush.bf16.msra.mxu0 %v272
    %316 = vmatpush.bf16.msra.mxu0 %v271
    %317 = vmatmul.bf16.gmra.mxu0 %v166
    %v318 = vpop.f32.mrf.mxu0
    %v319 = vadd.f32 %v305, %v318
    %v320 = vpop.f32.mrf.mxu0
    %v321 = vadd.f32 %v307, %v320
    %322 = vdwg.mxu0
    %v323 = vmax.f32 %v319, 1e-10
    %v324 = vmax.f32 %v321, 1e-10
    %v325 = vlog2.pop %v323
    %v326 = vmul.f32 %v325, 0.6931472
    %v327 = vlog2.pop %v324
    %v328 = vmul.f32 %v327, 0.6931472
    %v329 = vmul.f32 %v326, 4.3429446
    %v330 = vmul.f32 %v328, 4.3429446
    %v331 = vld [vmem:[#allocation4] sm:$0xff]
    %v332 = vld [vmem:[#allocation4 + $0x8] sm:$0xff]
    %v333 = vld [vmem:[#allocation4 + $0x10] sm:$0xff]
    %v334 = vld [vmem:[#allocation4 + $0x18] sm:$0xff]
    %vm335 = vcmask 261120
    %v337 = vsel %vm335, %v329, 0
    %v340 = vsel %vm335, %v330, 0
    %342 = vmatpush.msra.mxu0 0.0
    %343 = vmatpush.msra.mxu0 0.0
    %344 = vmatpush.msra.mxu0 0.0
    %345 = vmatpush.msra.mxu0 0.0
    %346 = vmatpush.msra.mxu0 0.0
    %347 = vmatpush.msra.mxu0 0.0
    %348 = vmatpush.msra.mxu0 0.0
    %349 = vmatpush.msra.mxu0 0.0
    %350 = vmatpush.msra.mxu0 0.0
    %351 = vmatpush.msra.mxu0 0.0
    %352 = vmatpush.msra.mxu0 0.0
    %353 = vmatpush.msra.mxu0 0.0
    %354 = vmatpush.msra.mxu0 %v334
    %355 = vmatpush.msra.mxu0 %v333
    %356 = vmatpush.msra.mxu0 %v332
    %357 = vmatpush.msra.mxu0 %v331
    %358 = vmatmul.f32.gmra.mxu0 %v337
    %v359 = vpop.f32.mrf.mxu0
    %v360 = vadd.f32 0.0, %v359
    %361 = vmatmul.f32.gmra.mxu0 %v340
    %v362 = vpop.f32.mrf.mxu0
    %v363 = vadd.f32 0.0, %v362
    %364 = vdwg.mxu0
    %vm365 = vcmask 130048
    %366 = vst.msk [vmem:[%s4] sm:$0xff] %vm365, %v360
    %367 = vst.msk [vmem:[%s4 + $0x8] sm:$0xff] %vm365, %v363
    // Predicated region
    $region26: #{a_call__.1} parent=1 // pred_check
      _
    $region27: #{a_call__.1} parent=1 // pred_check_branch
      %369 = sbr.rel (0) target = $region29
    $region28: #{a_call__.1} parent=1 // pred_region
      _
    $region29: #{a_call__.1} parent=1 // pred_fallthru
      _
    // Predicated region
    $region30: #{a_call__.1} parent=1 // pred_check
      _
    $region31: #{a_call__.1} parent=1 // pred_check_branch
      %371 = sbr.rel (0) target = $region33
    $region32: #{a_call__.1} parent=1 // pred_region
      _
    $region33: #{a_call__.1} parent=1 // pred_fallthru
      _
    %372 = vsyncpa [#allocation3], 1
    %373 = vsyncpa [#allocation5], 1

</llo_original>
